<compile_context>
chip_gen: v6e
topology: v6e:2x2x1
jax: 0.10.0
libtpu: 0.0.40
codegen_flags: <defaults>
</compile_context>

<pallas_src>
import functools

import jax
import jax.numpy as jnp
from jax import lax
from jax.experimental import pallas as pl
from jax.experimental.pallas import tpu as pltpu

LN_EPS = 1e-5
LEAKY_SLOPE = 0.01  # nn.LeakyReLU default negative_slope


def _head_kernel(x_ref, w_ref, gamma_ref, beta_ref, o_ref, *, nb):
    # x_ref:     (nb, Cin, HW)   activations (f32 or bf16)
    # w_ref:     (Cout, Cin)     1x1 conv weight (same dtype as x)
    # gamma_ref: (1, HW)         LayerNorm([H, W]) weight, flattened (f32)
    # beta_ref:  (1, HW)         LayerNorm([H, W]) bias,  flattened (f32)
    # o_ref:     (nb, Cout, HW)  f32 output
    w = w_ref[...]
    gamma = gamma_ref[...]
    beta = beta_ref[...]
    inv_hw = 1.0 / o_ref.shape[-1]          # block spans the full (true) HW

    for n in range(nb):                      # static, small unrolled loop
        x = x_ref[n]                                              # (Cin, HW)

        # 1x1 conv == channel matmul on the MXU, f32 accumulation.
        # (conv bias intentionally omitted: a per-channel constant is exactly
        #  cancelled by the LayerNorm mean subtraction below)
        y = jnp.dot(w, x, preferred_element_type=jnp.float32)     # (Cout, HW)

        # LayerNorm over (H, W): reduce over the lane-friendly last axis.
        mean = jnp.sum(y, axis=-1, keepdims=True) * inv_hw
        cen = y - mean
        var = jnp.sum(cen * cen, axis=-1, keepdims=True) * inv_hw
        scale = lax.rsqrt(var + LN_EPS) * gamma                   # (Cout, HW)
        z = cen * scale + beta

        # LeakyReLU (single max; valid for 0 < slope < 1)
        o_ref[n] = jnp.maximum(z, LEAKY_SLOPE * z).astype(o_ref.dtype)


def network_head(x_nchw, w, gamma_hw, beta_hw, *, nb=None,
                 matmul_dtype=jnp.float32):
    """x_nchw: (N, Cin, H, W) -> (N, 1, Cout, H, W) float32.

    Fused  Conv2d(Cin, Cout, 1, bias)  ->  LayerNorm([H, W])  ->  LeakyReLU.
    (The conv bias is a mathematical no-op under layerHW normalization and is
    not passed to the kernel.)
    """
    N, Cin, H, W = x_nchw.shape
    Cout = w.shape[0]
    HW = H * W

    if nb is None:
        # At least 2 grid steps when N >= 2 so both v7x TensorCores get work;
        # cap nb to keep the double-buffered block footprint small.
        nb = max(1, min(8, N // 2)) if N >= 2 else 1

    x_flat = x_nchw.reshape(N, Cin, HW).astype(matmul_dtype)
    n_pad = (-N) % nb
    if n_pad:
        x_flat = jnp.pad(x_flat, ((0, n_pad), (0, 0), (0, 0)))
    n_total = N + n_pad
    grid_n = n_total // nb

    w_c = w.astype(matmul_dtype)
    gamma = gamma_hw.reshape(1, HW).astype(jnp.float32)
    beta = beta_hw.reshape(1, HW).astype(jnp.float32)

    kernel = functools.partial(_head_kernel, nb=nb)

    out_flat = pl.pallas_call(
        kernel,
        out_shape=jax.ShapeDtypeStruct((n_total, Cout, HW), jnp.float32),
        grid_spec=pltpu.PrefetchScalarGridSpec(
            num_scalar_prefetch=0,
            grid=(grid_n,),
            in_specs=[
                pl.BlockSpec((nb, Cin, HW), lambda i: (i, 0, 0)),
                pl.BlockSpec((Cout, Cin), lambda i: (0, 0)),
                pl.BlockSpec((1, HW), lambda i: (0, 0)),
                pl.BlockSpec((1, HW), lambda i: (0, 0)),
            ],
            out_specs=pl.BlockSpec((nb, Cout, HW), lambda i: (i, 0, 0)),
        ),
        compiler_params=pltpu.CompilerParams(
            dimension_semantics=("parallel",)),
    )(x_flat, w_c, gamma, beta)

    out = out_flat[:N].reshape(N, Cout, H, W)
    return out[:, None, :, :, :]   # .unsqueeze(1)


def _reference(x_nchw, w, b, gamma_hw, beta_hw):
    # plain-JAX reference (keeps the conv bias, exactly as PyTorch would)
    y = jnp.einsum("oc,nchw->nohw", w, x_nchw) + b[None, :, None, None]
    mean = y.mean(axis=(-2, -1), keepdims=True)
    var = ((y - mean) ** 2).mean(axis=(-2, -1), keepdims=True)
    yhat = (y - mean) / jnp.sqrt(var + LN_EPS)
    z = yhat * gamma_hw[None, None] + beta_hw[None, None]
    out = jnp.where(z >= 0, z, LEAKY_SLOPE * z)
    return out[:, None]


if __name__ == "__main__":
    # small config: f=32 feature channels, num_class=8, oup_dim=(16,16)
    N, F, H, W = 2, 32, 16, 16
    NUM_CLASS = 8

    key = jax.random.PRNGKey(0)
    kx, kw, kb = jax.random.split(key, 3)

    # "hidden" feature map (prenet + base treated as identity; see TODO above)
    x = jax.random.normal(kx, (N, F, H, W), dtype=jnp.float32)

    # classifier (Conv2d(f, num_class, 1)) parameters; bias only used by the
    # reference (it is cancelled by LayerNorm([H, W]))
    w = jax.random.normal(kw, (NUM_CLASS, F), dtype=jnp.float32) * 0.05
    b = jax.random.normal(kb, (NUM_CLASS,), dtype=jnp.float32) * 0.05

    # LayerNorm([H, W]) affine params at their PyTorch init values
    gamma = jnp.ones((H, W), dtype=jnp.float32)
    beta = jnp.zeros((H, W), dtype=jnp.float32)

    ref = _reference(x, w, b, gamma, beta)

    # f32 matmul path (exact parity with the PyTorch head)
    out_f32 = jax.block_until_ready(network_head(x, w, gamma, beta))
    assert out_f32.shape == (N, 1, NUM_CLASS, H, W), out_f32.shape
    assert jnp.allclose(out_f32, ref, atol=1e-4, rtol=1e-4)

    # bf16 matmul-operand path (halves the dominant x DMA; f32 accumulation
    # and f32 LayerNorm/LeakyReLU math) -- looser tolerance for bf16 rounding.
    out_bf16 = jax.block_until_ready(
        network_head(x, w, gamma, beta, matmul_dtype=jnp.bfloat16))
    assert out_bf16.shape == (N, 1, NUM_CLASS, H, W), out_bf16.shape
    assert jnp.allclose(out_bf16, ref, atol=3e-2, rtol=3e-2)

    print("KERNEL_OK")
</pallas_src>

<mosaic_0001>
module attributes {stable_mosaic.version = 11 : i64} {
  func.func @_head_kernel(%arg0: i32, %arg1: memref<1x32x256xf32, #tpu.memory_space<vmem>>, %arg2: memref<8x32xf32, #tpu.memory_space<vmem>>, %arg3: memref<1x256xf32, #tpu.memory_space<vmem>>, %arg4: memref<1x256xf32, #tpu.memory_space<vmem>>, %arg5: memref<1x8x256xf32, #tpu.memory_space<vmem>>) attributes {dimension_semantics = [#tpu.dimension_semantics<parallel>], iteration_bounds = array<i64: 2>, scalar_prefetch = 0 : i64, scratch_operands = 0 : i64, tpu.core_type = #tpu.core_type<tc>, window_params = [{transform_indices = @transform_0, window_bounds = array<i64: 1, 32, 256>}, {pipeline_mode = #tpu.pipeline_mode<synchronous>, transform_indices = @transform_1, window_bounds = array<i64: 8, 32>}, {pipeline_mode = #tpu.pipeline_mode<synchronous>, transform_indices = @transform_2, window_bounds = array<i64: 1, 256>}, {pipeline_mode = #tpu.pipeline_mode<synchronous>, transform_indices = @transform_3, window_bounds = array<i64: 1, 256>}, {transform_indices = @transform_4, window_bounds = array<i64: 1, 8, 256>}]} {
    %c0 = arith.constant 0 : index
    %c0_0 = arith.constant 0 : index
    %0 = vector.load %arg2[%c0, %c0_0] : memref<8x32xf32, #tpu.memory_space<vmem>>, vector<8x32xf32>
    %c0_1 = arith.constant 0 : index
    %c0_2 = arith.constant 0 : index
    %1 = vector.load %arg3[%c0_1, %c0_2] : memref<1x256xf32, #tpu.memory_space<vmem>>, vector<1x256xf32>
    %c0_3 = arith.constant 0 : index
    %c0_4 = arith.constant 0 : index
    %2 = vector.load %arg4[%c0_3, %c0_4] : memref<1x256xf32, #tpu.memory_space<vmem>>, vector<1x256xf32>
    %c0_5 = arith.constant 0 : index
    %c0_6 = arith.constant 0 : index
    %c0_7 = arith.constant 0 : index
    %3 = vector.load %arg1[%c0_5, %c0_6, %c0_7] : memref<1x32x256xf32, #tpu.memory_space<vmem>>, vector<1x32x256xf32>
    %4 = vector.shape_cast %3 : vector<1x32x256xf32> to vector<32x256xf32>
    %cst = arith.constant dense<0.000000e+00> : vector<8x256xf32>
    %5 = tpu.matmul %0, %4, %cst {dimension_numbers = #tpu.dot_dimension_numbers<[1], [0], [0], [1], [0, 0, 1, 1], [], []>} : vector<8x32xf32>, vector<32x256xf32>, vector<8x256xf32> -> vector<8x256xf32>
    %cst_8 = arith.constant dense<0.000000e+00> : vector<8xf32>
    %6 = vector.multi_reduction <add>, %5, %cst_8 [1] : vector<8x256xf32> to vector<8xf32>
    %7 = vector.shape_cast %6 : vector<8xf32> to vector<8x1xf32>
    %cst_9 = arith.constant 3.906250e-03 : f32
    %8 = vector.broadcast %cst_9 : f32 to vector<8x1xf32>
    %9 = arith.mulf %7, %8 : vector<8x1xf32>
    %10 = vector.broadcast %9 : vector<8x1xf32> to vector<8x256xf32>
    %11 = arith.subf %5, %10 : vector<8x256xf32>
    %12 = arith.mulf %11, %11 : vector<8x256xf32>
    %cst_10 = arith.constant dense<0.000000e+00> : vector<8xf32>
    %13 = vector.multi_reduction <add>, %12, %cst_10 [1] : vector<8x256xf32> to vector<8xf32>
    %14 = vector.shape_cast %13 : vector<8xf32> to vector<8x1xf32>
    %cst_11 = arith.constant 3.906250e-03 : f32
    %15 = vector.broadcast %cst_11 : f32 to vector<8x1xf32>
    %16 = arith.mulf %14, %15 : vector<8x1xf32>
    %cst_12 = arith.constant 9.99999974E-6 : f32
    %17 = vector.broadcast %cst_12 : f32 to vector<8x1xf32>
    %18 = arith.addf %16, %17 : vector<8x1xf32>
    %19 = math.rsqrt %18 : vector<8x1xf32>
    %20 = vector.broadcast %19 : vector<8x1xf32> to vector<8x256xf32>
    %21 = vector.broadcast %1 : vector<1x256xf32> to vector<8x256xf32>
    %22 = arith.mulf %20, %21 : vector<8x256xf32>
    %23 = arith.mulf %11, %22 : vector<8x256xf32>
    %24 = vector.broadcast %2 : vector<1x256xf32> to vector<8x256xf32>
    %25 = arith.addf %23, %24 : vector<8x256xf32>
    %cst_13 = arith.constant 0.00999999977 : f32
    %26 = vector.broadcast %cst_13 : f32 to vector<8x256xf32>
    %27 = arith.mulf %26, %25 : vector<8x256xf32>
    %28 = arith.maximumf %25, %27 : vector<8x256xf32>
    %c0_14 = arith.constant 0 : index
    %c0_15 = arith.constant 0 : index
    %c0_16 = arith.constant 0 : index
    %29 = vector.load %arg5[%c0_14, %c0_15, %c0_16] : memref<1x8x256xf32, #tpu.memory_space<vmem>>, vector<1x8x256xf32>
    %30 = vector.shape_cast %29 : vector<1x8x256xf32> to vector<8x256xf32>
    %31 = vector.shape_cast %28 : vector<8x256xf32> to vector<1x8x256xf32>
    tpu.vector_store %arg5[%c0_14, %c0_15, %c0_16], %31 {strides = array<i32>} : memref<1x8x256xf32, #tpu.memory_space<vmem>>, vector<1x8x256xf32>,
    return
  }
  func.func @transform_0(%arg0: i32) -> (i32, i32, i32) {
    %c0_i32 = arith.constant 0 : i32
    %c0_i32_0 = arith.constant 0 : i32
    %c0_i32_1 = arith.constant 0 : i32
    return %arg0, %c0_i32, %c0_i32_0 : i32, i32, i32
  }
  func.func @transform_1(%arg0: i32) -> (i32, i32) {
    %c0_i32 = arith.constant 0 : i32
    %c0_i32_0 = arith.constant 0 : i32
    %c0_i32_1 = arith.constant 0 : i32
    return %c0_i32, %c0_i32_0 : i32, i32
  }
  func.func @transform_2(%arg0: i32) -> (i32, i32) {
    %c0_i32 = arith.constant 0 : i32
    %c0_i32_0 = arith.constant 0 : i32
    %c0_i32_1 = arith.constant 0 : i32
    return %c0_i32, %c0_i32_0 : i32, i32
  }
  func.func @transform_3(%arg0: i32) -> (i32, i32) {
    %c0_i32 = arith.constant 0 : i32
    %c0_i32_0 = arith.constant 0 : i32
    %c0_i32_1 = arith.constant 0 : i32
    return %c0_i32, %c0_i32_0 : i32, i32
  }
  func.func @transform_4(%arg0: i32) -> (i32, i32, i32) {
    %c0_i32 = arith.constant 0 : i32
    %c0_i32_0 = arith.constant 0 : i32
    %c0_i32_1 = arith.constant 0 : i32
    return %arg0, %c0_i32, %c0_i32_0 : i32, i32, i32
  }
}

</mosaic_0001>

<llo_original>
// kernel: tpu_custom_call.1
$region0: #{tpu_custom_call.1}
  #allocation0 [shape = 'u32[]', space=smem, size = 0x4, offset = 0x4, fixed_abs, tag = 'smem constant byte address 0x4 - core index']
  #allocation1 [shape = 'u32[144,128]{1,0:T(1,128)}', space=vmem, size = 0x12000, scoped, tag = 'internal scratch']
  %s0 = inlined_call_operand.hbm [shape: f32[2,32,256], index: 0, kind: input, shape index: {}]
  %s1 = inlined_call_operand.hbm [shape: f32[8,32], index: 1, kind: input, shape index: {}]
  %s2 = inlined_call_operand.vmem [shape: f32[1,256], index: 2, kind: input, shape index: {}]
  %s3 = inlined_call_operand.vmem [shape: f32[1,256], index: 3, kind: input, shape index: {}]
  %s4 = inlined_call_operand.hbm [shape: f32[2,8,256], index: 4, kind: output, shape index: {}]
  %s5 = sld [smem:[#allocation0]]
  $region57: #{tpu_custom_call.1} parent=0
    _
  %s7 = ssub.s32 1, %s5
  %s8 = scalar_select 0, %s7, %s5
  $region1: #{tpu_custom_call.1} parent=0
    #allocation2 [shape = 'u8[65536]{0}', space=vmem, size = 0x10000, scoped, tag = 'input window, operand 0']
    #allocation3 [shape = 's32[2]{0}', space=sflag, size = 0x8, scoped, tag = 'scoped memory for tpu_custom_call.1']
    #allocation4 [shape = 's32[2]{0}', space=sflag, size = 0x8, scoped, tag = 'scoped memory for tpu_custom_call.1']
    #allocation5 [shape = 'u8[4096]{0}', space=vmem, size = 0x1000, scoped, tag = 'input window, operand 1, single buffered']
    #allocation6 [shape = 's32[1]{0}', space=sflag, size = 0x4, scoped, tag = 'scoped memory for tpu_custom_call.1']
    #allocation7 [shape = 'u8[16384]{0}', space=vmem, size = 0x4000, scoped, tag = 'output window, operand 0']
    %9 = vsyncpa [#allocation3], 0
    %s10 = scalar_lea.sflag [#allocation3], 1
    %11 = vsyncpa %s10, 0
    %12 = vsyncpa [#allocation6], 0
    %13 = vsyncpa [#allocation4], 0
    %s14 = scalar_lea.sflag [#allocation4], 1
    %15 = vsyncpa %s14, 0
    loop: start=0, step=1, limit=4
    $region2: #{tpu_custom_call.1} parent=1 // loop_pre_header
      _
    $region3: #{tpu_custom_call.1} parent=1 // loop_header
      %s17 = sphi 0, %s21
      %p18 = scmp.ge.s32.totalorder %s17, 4
      %s27 = sphi 0, %s29
      %s30 = sphi 0, %s27
      %s31 = sphi 0, %s30
      %s47 = sphi 0, %s31
      %s51 = sphi 0, %s51
      %s53 = sphi 0, %s51
      %s54 = sphi 0, %s53
      %s68 = sphi 0, %s54
      %s72 = sphi 0, %s72
      %s74 = sphi 0, %s72
      %s75 = sphi 0, %s74
      %s89 = sphi 0, %s75
      %s93 = sphi 0, %s93
      %s95 = sphi 0, %s93
      %s96 = sphi 0, %s95
      %s110 = sphi 0, %s96
      %s116 = sphi 0, %s118
      %s119 = sphi 0, %s116
      %s120 = sphi 0, %s119
      %s136 = sphi 0, %s120
    $region4: #{tpu_custom_call.1} parent=1 // loop_header_branch
      %20 = sbr.rel (%p18) target = $region8
    $region5: #{tpu_custom_call.1} parent=1 // loop_body
      %s22 = ssub.s32 %s17, 1
      %s23 = ssub.s32 %s17, 2
      %s24 = sadd.s32 %s17, 1
      %s25 = ssub.s32 %s17, %s24
      %p26 = scmp.eq.s32.totalorder %s25, 0
      %s28 = sadd.s32 %s27, 1
      %s29 = scalar_select %p26, %s27, %s28
      %p32 = pneg %p26
      %p33 = scmp.eq.s32.totalorder %s17, 1
      %p34 = por %p32, %p33
      %p35 = scmp.ne.s32.totalorder %s27, %s30
      %p36 = scmp.eq.s32.totalorder %s17, 0
      %p37 = por %p35, %p36
      %p38 = scmp.ne.s32.totalorder %s27, %s30
      %p39 = scmp.eq.s32.totalorder %s22, 1
      %p40 = por %p38, %p39
      %p41 = scmp.ne.s32.totalorder %s30, %s31
      %p42 = scmp.eq.s32.totalorder %s22, 0
      %p43 = por %p41, %p42
      %p44 = scmp.ne.s32.totalorder %s30, %s31
      %p45 = scmp.eq.s32.totalorder %s23, 1
      %p46 = por %p44, %p45
      %p48 = scmp.ne.s32.totalorder %s31, %s47
      %p49 = scmp.eq.s32.totalorder %s23, 0
      %p50 = por %p48, %p49
      %s52 = sadd.s32 %s51, 1
      %p55 = scmp.eq.s32.totalorder %s17, 1
      %p56 = scmp.ne.s32.totalorder %s51, %s53
      %p57 = scmp.eq.s32.totalorder %s17, 0
      %p58 = por %p56, %p57
      %p59 = scmp.ne.s32.totalorder %s51, %s53
      %p60 = scmp.eq.s32.totalorder %s22, 1
      %p61 = por %p59, %p60
      %p62 = scmp.ne.s32.totalorder %s53, %s54
      %p63 = scmp.eq.s32.totalorder %s22, 0
      %p64 = por %p62, %p63
      %p65 = scmp.ne.s32.totalorder %s53, %s54
      %p66 = scmp.eq.s32.totalorder %s23, 1
      %p67 = por %p65, %p66
      %p69 = scmp.ne.s32.totalorder %s54, %s68
      %p70 = scmp.eq.s32.totalorder %s23, 0
      %p71 = por %p69, %p70
      %s73 = sadd.s32 %s72, 1
      %p76 = scmp.eq.s32.totalorder %s17, 1
      %p77 = scmp.ne.s32.totalorder %s72, %s74
      %p78 = scmp.eq.s32.totalorder %s17, 0
      %p79 = por %p77, %p78
      %p80 = scmp.ne.s32.totalorder %s72, %s74
      %p81 = scmp.eq.s32.totalorder %s22, 1
      %p82 = por %p80, %p81
      %p83 = scmp.ne.s32.totalorder %s74, %s75
      %p84 = scmp.eq.s32.totalorder %s22, 0
      %p85 = por %p83, %p84
      %p86 = scmp.ne.s32.totalorder %s74, %s75
      %p87 = scmp.eq.s32.totalorder %s23, 1
      %p88 = por %p86, %p87
      %p90 = scmp.ne.s32.totalorder %s75, %s89
      %p91 = scmp.eq.s32.totalorder %s23, 0
      %p92 = por %p90, %p91
      %s94 = sadd.s32 %s93, 1
      %p97 = scmp.eq.s32.totalorder %s17, 1
      %p98 = scmp.ne.s32.totalorder %s93, %s95
      %p99 = scmp.eq.s32.totalorder %s17, 0
      %p100 = por %p98, %p99
      %p101 = scmp.ne.s32.totalorder %s93, %s95
      %p102 = scmp.eq.s32.totalorder %s22, 1
      %p103 = por %p101, %p102
      %p104 = scmp.ne.s32.totalorder %s95, %s96
      %p105 = scmp.eq.s32.totalorder %s22, 0
      %p106 = por %p104, %p105
      %p107 = scmp.ne.s32.totalorder %s95, %s96
      %p108 = scmp.eq.s32.totalorder %s23, 1
      %p109 = por %p107, %p108
      %p111 = scmp.ne.s32.totalorder %s96, %s110
      %p112 = scmp.eq.s32.totalorder %s23, 0
      %p113 = por %p111, %p112
      %s114 = ssub.s32 %s17, %s24
      %p115 = scmp.eq.s32.totalorder %s114, 0
      %s117 = sadd.s32 %s116, 1
      %s118 = scalar_select %p115, %s116, %s117
      %p121 = pneg %p115
      %p122 = scmp.eq.s32.totalorder %s17, 1
      %p123 = por %p121, %p122
      %p124 = scmp.ne.s32.totalorder %s116, %s119
      %p125 = scmp.eq.s32.totalorder %s17, 0
      %p126 = por %p124, %p125
      %p127 = scmp.ne.s32.totalorder %s116, %s119
      %p128 = scmp.eq.s32.totalorder %s22, 1
      %p129 = por %p127, %p128
      %p130 = scmp.ne.s32.totalorder %s119, %s120
      %p131 = scmp.eq.s32.totalorder %s22, 0
      %p132 = por %p130, %p131
      %p133 = scmp.ne.s32.totalorder %s119, %s120
      %p134 = scmp.eq.s32.totalorder %s23, 1
      %p135 = por %p133, %p134
      %p137 = scmp.ne.s32.totalorder %s120, %s136
      %p138 = scmp.eq.s32.totalorder %s23, 0
      %p139 = por %p137, %p138
      %p140 = scmp.le.s32.totalorder 1, %s17
      %p141 = scmp.lt.s32.totalorder %s17, 3
      %p142 = pnand %p140, %p141
      %p143 = pneg %p142
      // Predicated region
      $region9: #{tpu_custom_call.1} parent=5 // pred_check
        _
      $region10: #{tpu_custom_call.1} parent=5 // pred_check_branch
        %145 = sbr.rel (%p142) target = $region12
      $region11: #{tpu_custom_call.1} parent=5 // pred_region
        %s146 = ssub.s32 %s17, 1
        // Predicated region
        $region13: #{tpu_custom_call.1} parent=11 // pred_check
          %p147 = pneg %p64
        $region14: #{tpu_custom_call.1} parent=11 // pred_check_branch
          %149 = sbr.rel (%p147) target = $region16
        $region15: #{tpu_custom_call.1} parent=11 // pred_region
          %s151 = ssub.s32 128, 128
          %152 = vsyncadd [#allocation6], %s151
          %s154 = sshll.u32 [#allocation5], 4
          %s155 = int_to_ptr.vmem [resolvable:$true] %s154
          %157 = dma.hbm_to_vmem [thread:$0]  %s1, 128, %s155, [#allocation6]
        $region16: #{tpu_custom_call.1} parent=11 // pred_fallthru
          _
        // Predicated region
        $region17: #{tpu_custom_call.1} parent=11 // pred_check
          %p158 = pneg %p85
        $region18: #{tpu_custom_call.1} parent=11 // pred_check_branch
          %160 = sbr.rel (%p158) target = $region20
        $region19: #{tpu_custom_call.1} parent=11 // pred_region
          _
        $region20: #{tpu_custom_call.1} parent=11 // pred_fallthru
          _
        // Predicated region
        $region21: #{tpu_custom_call.1} parent=11 // pred_check
          %p161 = pneg %p106
        $region22: #{tpu_custom_call.1} parent=11 // pred_check_branch
          %163 = sbr.rel (%p161) target = $region24
        $region23: #{tpu_custom_call.1} parent=11 // pred_region
          _
        $region24: #{tpu_custom_call.1} parent=11 // pred_fallthru
          _
      $region12: #{tpu_custom_call.1} parent=5 // pred_fallthru
        _
      %p164 = scmp.lt.s32.totalorder %s17, 2
      // Predicated region
      $region25: #{tpu_custom_call.1} parent=5 // pred_check
        %p165 = pneg %p164
      $region26: #{tpu_custom_call.1} parent=5 // pred_check_branch
        %167 = sbr.rel (%p165) target = $region28
      $region27: #{tpu_custom_call.1} parent=5 // pred_region
        // Predicated region
        $region29: #{tpu_custom_call.1} parent=27 // pred_check
          %p168 = pneg %p37
        $region30: #{tpu_custom_call.1} parent=27 // pred_check_branch
          %170 = sbr.rel (%p168) target = $region32
        $region31: #{tpu_custom_call.1} parent=27 // pred_region
          %s171 = sand.u32 %s27, 1
          %s172 = scalar_lea.sflag [#allocation3], %s171
          %s173 = sand.u32 %s27, 1
          %s174 = smul.addr %s173, 64
          %s175 = scalar_lea.vmem [#allocation2], %s174
          %s177 = ssub.s32 1024, 1024
          %178 = vsyncadd %s172, %s177
          %s179 = smul.addr %s17, 8
          %s180 = smul.addr %s179, 128
          %s181 = scalar_lea.hbm %s0, %s180
          %s182 = sshll.u32 %s175, 4
          %s183 = int_to_ptr.vmem [resolvable:$true] %s182
          %188 = dma.hbm_to_vmem [thread:$0]  %s181, 1024, %s183, %s172, 256, 256, 16
        $region32: #{tpu_custom_call.1} parent=27 // pred_fallthru
          _
      $region28: #{tpu_custom_call.1} parent=5 // pred_fallthru
        _
      %p189 = scmp.le.s32.totalorder 1, %s17
      %p190 = scmp.lt.s32.totalorder %s17, 3
      %p191 = pnand %p189, %p190
      %p192 = pneg %p191
      // Predicated region
      $region33: #{tpu_custom_call.1} parent=5 // pred_check
        _
      $region34: #{tpu_custom_call.1} parent=5 // pred_check_branch
        %194 = sbr.rel (%p191) target = $region36
      $region35: #{tpu_custom_call.1} parent=5 // pred_region
        %s195 = ssub.s32 %s17, 1
        %s196 = sand.u32 %s30, 1
        %s197 = scalar_lea.sflag [#allocation3], %s196
        %s198 = sand.u32 %s30, 1
        %s199 = smul.addr %s198, 64
        %s200 = scalar_lea.vmem [#allocation2], %s199
        // Predicated region
        $region37: #{tpu_custom_call.1} parent=35 // pred_check
          %p201 = pneg %p43
        $region38: #{tpu_custom_call.1} parent=35 // pred_check_branch
          %203 = sbr.rel (%p201) target = $region40
        $region39: #{tpu_custom_call.1} parent=35 // pred_region
          %204 = dma.done %s197, 1024
        $region40: #{tpu_custom_call.1} parent=35 // pred_fallthru
          _
        // Predicated region
        $region41: #{tpu_custom_call.1} parent=35 // pred_check
          %p205 = pneg %p64
        $region42: #{tpu_custom_call.1} parent=35 // pred_check_branch
          %207 = sbr.rel (%p205) target = $region44
        $region43: #{tpu_custom_call.1} parent=35 // pred_region
          %208 = dma.done [#allocation6], 128
        $region44: #{tpu_custom_call.1} parent=35 // pred_fallthru
          _
        %s209 = sand.u32 %s30, 1
        %s210 = scalar_lea.sflag [#allocation3], %s209
        %s211 = sand.u32 %s30, 1
        %s212 = smul.addr %s211, 64
        %s213 = scalar_lea.vmem [#allocation2], %s212
        %p214 = pneg %p43
        %p215 = pneg %p40
        %p216 = pneg %p64
        %p217 = pneg %p61
        %p218 = pneg %p85
        %p219 = pneg %p82
        %p220 = pneg %p106
        %p221 = pneg %p103
        %p222 = pneg %p132
        %p223 = pneg %p129
        %s224 = sand.u32 %s119, 1
        %s225 = scalar_lea.sflag [#allocation4], %s224
        %s226 = sand.u32 %s119, 1
        %s227 = smul.addr %s226, 16
        %s228 = scalar_lea.vmem [#allocation7], %s227
        %v229 = vld [vmem:[#allocation5] sm:$0xff]
        %v230 = vld [vmem:[%s2] sm:$0x3]
        %v231 = vld [vmem:[%s3] sm:$0x3]
        %v232 = vld [vmem:[%s200] sm:$0xff]
        %v233 = vld [vmem:[%s200 + $0x8] sm:$0xff]
        %v234 = vld [vmem:[%s200 + $0x10] sm:$0xff]
        %v235 = vld [vmem:[%s200 + $0x18] sm:$0xff]
        %v236 = vld [vmem:[%s200 + $0x20] sm:$0xff]
        %v237 = vld [vmem:[%s200 + $0x28] sm:$0xff]
        %v238 = vld [vmem:[%s200 + $0x30] sm:$0xff]
        %v239 = vld [vmem:[%s200 + $0x38] sm:$0xff]
        %vm240 = vcmask 261120
        %v242 = vsel %vm240, %v229, 0
        %244 = vmatprep.subr.mxu0 0.0
        %245 = vmatpush1.msra.mxu0 0.0
        %246 = vmatprep.subr.mxu0 0.0
        %247 = vmatpush1.msra.mxu0 0.0
        %248 = vmatprep.subr.mxu0 0.0
        %249 = vmatpush1.msra.mxu0 0.0
        %250 = vmatprep.subr.mxu0 0.0
        %251 = vmatpush1.msra.mxu0 0.0
        %252 = vmatprep.subr.mxu0 0.0
        %253 = vmatpush1.msra.mxu0 0.0
        %254 = vmatprep.subr.mxu0 0.0
        %255 = vmatpush1.msra.mxu0 0.0
        %256 = vmatprep.subr.mxu0 0.0
        %257 = vmatpush1.msra.mxu0 0.0
        %258 = vmatprep.subr.mxu0 0.0
        %259 = vmatpush1.msra.mxu0 0.0
        %260 = vmatprep.subr.mxu0 0.0
        %261 = vmatpush1.msra.mxu0 0.0
        %262 = vmatprep.subr.mxu0 0.0
        %263 = vmatpush1.msra.mxu0 0.0
        %264 = vmatprep.subr.mxu0 0.0
        %265 = vmatpush1.msra.mxu0 0.0
        %266 = vmatprep.subr.mxu0 0.0
        %267 = vmatpush1.msra.mxu0 0.0
        %268 = vmatprep.subr.mxu0 %v239
        %269 = vmatpush1.msra.mxu0 %v238
        %270 = vmatprep.subr.mxu0 %v237
        %271 = vmatpush1.msra.mxu0 %v236
        %272 = vmatprep.subr.mxu0 %v235
        %273 = vmatpush1.msra.mxu0 %v234
        %274 = vmatprep.subr.mxu0 %v233
        %275 = vmatpush1.msra.mxu0 %v232
        %276 = vmatprep.subr.mxu0 0.0
        %277 = vmatpush2.msra.mxu0 0.0
        %278 = vmatprep.subr.mxu0 0.0
        %279 = vmatpush2.msra.mxu0 0.0
        %280 = vmatprep.subr.mxu0 0.0
        %281 = vmatpush2.msra.mxu0 0.0
        %282 = vmatprep.subr.mxu0 0.0
        %283 = vmatpush2.msra.mxu0 0.0
        %284 = vmatprep.subr.mxu0 0.0
        %285 = vmatpush2.msra.mxu0 0.0
        %286 = vmatprep.subr.mxu0 0.0
        %287 = vmatpush2.msra.mxu0 0.0
        %288 = vmatprep.subr.mxu0 0.0
        %289 = vmatpush2.msra.mxu0 0.0
        %290 = vmatprep.subr.mxu0 0.0
        %291 = vmatpush2.msra.mxu0 0.0
        %292 = vmatprep.subr.mxu0 0.0
        %293 = vmatpush2.msra.mxu0 0.0
        %294 = vmatprep.subr.mxu0 0.0
        %295 = vmatpush2.msra.mxu0 0.0
        %296 = vmatprep.subr.mxu0 0.0
        %297 = vmatpush2.msra.mxu0 0.0
        %298 = vmatprep.subr.mxu0 0.0
        %299 = vmatpush2.msra.mxu0 0.0
        %300 = vmatprep.subr.mxu0 0.0
        %301 = vmatpush2.msra.mxu0 0.0
        %302 = vmatprep.subr.mxu0 0.0
        %303 = vmatpush2.msra.mxu0 0.0
        %304 = vmatprep.subr.mxu0 0.0
        %305 = vmatpush2.msra.mxu0 0.0
        %306 = vmatprep.subr.mxu0 0.0
        %307 = vmatpush2.msra.mxu0 0.0
        %308 = vmatprep.mubr.f32.mxu0 0.0
        %309 = vmatmul.mubr.f32.gmra.mxu0 %v242
        %v310 = vpop.f32.mrf.mxu0
        %v311 = vadd.f32 0.0, %v310
        %v312 = vpop.f32.mrf.mxu0
        %v313 = vadd.f32 0.0, %v312
        %314 = vdwg.mxu0
        %v315 = vadd.f32 %v311, %v313
        %316 = vadd.xlane.f32.xlu0 %v315
        %v317 = vpop.xlane.xlu0 %316
        %v318 = vmul.f32 %v317, 0.00390625
        %v319 = vsub.f32 %v311, %v318
        %v320 = vsub.f32 %v313, %v318
        %v321 = vmul.f32 %v319, %v319
        %v322 = vmul.f32 %v320, %v320
        %v323 = vadd.f32 %v321, %v322
        %324 = vadd.xlane.f32.xlu0 %v323
        %v325 = vpop.xlane.xlu0 %324
        %v326 = vmul.f32 %v325, 0.00390625
        %v327 = vadd.f32 %v326, 1e-05
        %v328 = vrsqrt.pop %v327
        %v330 = vlaneseq
        %v331 = vshrl.u32 %v330, 7
        %v332 = vsub.s32 0, %v331
        %v333 = vrot.slane %v230, %v332
        %v334 = vlaneseq
        %v335 = vshrl.u32 %v334, 7
        %v336 = vsub.s32 1, %v335
        %v337 = vrot.slane %v230, %v336
        %v340 = vmul.f32 %v328, %v333
        %v341 = vmul.f32 %v328, %v337
        %v342 = vmul.f32 %v319, %v340
        %v343 = vmul.f32 %v320, %v341
        %v345 = vlaneseq
        %v346 = vshrl.u32 %v345, 7
        %v347 = vsub.s32 0, %v346
        %v348 = vrot.slane %v231, %v347
        %v349 = vlaneseq
        %v350 = vshrl.u32 %v349, 7
        %v351 = vsub.s32 1, %v350
        %v352 = vrot.slane %v231, %v351
        %v355 = vadd.f32 %v342, %v348
        %v356 = vadd.f32 %v343, %v352
        %v357 = vmul.f32 %v355, 0.01
        %v358 = vmul.f32 %v356, 0.01
        %v359 = vmax.f32 %v355, %v357
        %v360 = vmax.f32 %v356, %v358
        %361 = vst [vmem:[%s228] sm:$0xff] %v359
        %362 = vst [vmem:[%s228 + $0x8] sm:$0xff] %v360
        %s363 = sand.u32 %s119, 1
        %s364 = scalar_lea.sflag [#allocation4], %s363
        %s365 = sand.u32 %s119, 1
        %s366 = smul.addr %s365, 16
        %s367 = scalar_lea.vmem [#allocation7], %s366
        // Predicated region
        $region45: #{tpu_custom_call.1} parent=35 // pred_check
          %p368 = pneg %p129
        $region46: #{tpu_custom_call.1} parent=35 // pred_check_branch
          %370 = sbr.rel (%p368) target = $region48
        $region47: #{tpu_custom_call.1} parent=35 // pred_region
          %s372 = ssub.s32 256, 256
          %373 = vsyncadd %s364, %s372
          %s374 = smul.addr %s22, 2
          %s375 = smul.addr %s374, 128
          %s376 = scalar_lea.hbm %s4, %s375
          %s378 = sshll.u32 %s367, 4
          %s379 = int_to_ptr.vmem [resolvable:$true] %s378
          %381 = dma.vmem_to_hbm [thread:$0]  %s379, 256, %s376, %s364
        $region48: #{tpu_custom_call.1} parent=35 // pred_fallthru
          _
      $region36: #{tpu_custom_call.1} parent=5 // pred_fallthru
        _
      %p382 = scmp.le.s32.totalorder 2, %s17
      // Predicated region
      $region49: #{tpu_custom_call.1} parent=5 // pred_check
        %p383 = pneg %p382
      $region50: #{tpu_custom_call.1} parent=5 // pred_check_branch
        %385 = sbr.rel (%p383) target = $region52
      $region51: #{tpu_custom_call.1} parent=5 // pred_region
        %s386 = ssub.s32 %s17, 2
        // Predicated region
        $region53: #{tpu_custom_call.1} parent=51 // pred_check
          %p387 = pneg %p135
        $region54: #{tpu_custom_call.1} parent=51 // pred_check_branch
          %389 = sbr.rel (%p387) target = $region56
        $region55: #{tpu_custom_call.1} parent=51 // pred_region
          %s390 = sand.u32 %s120, 1
          %s391 = scalar_lea.sflag [#allocation4], %s390
          %s392 = sand.u32 %s120, 1
          %s393 = smul.addr %s392, 16
          %s394 = scalar_lea.vmem [#allocation7], %s393
          %395 = dma.done %s391, 256
        $region56: #{tpu_custom_call.1} parent=51 // pred_fallthru
          _
      $region52: #{tpu_custom_call.1} parent=5 // pred_fallthru
        _
    $region6: #{tpu_custom_call.1} parent=1 // loop_footer
      %s21 = sadd.s32 1, %s17
    $region7: #{tpu_custom_call.1} parent=1 // loop_footer_branch
      %16 = sbr.rel target = $region3
    $region8: #{tpu_custom_call.1} parent=1 // loop_exit
      _
    %396 = vsyncpa [#allocation3], 1
    %s397 = scalar_lea.sflag [#allocation3], 1
    %398 = vsyncpa %s397, 1
    %399 = vsyncpa [#allocation6], 1
    %400 = vsyncpa [#allocation4], 1
    %s401 = scalar_lea.sflag [#allocation4], 1
    %402 = vsyncpa %s401, 1

</llo_original>
